<compile_context>
chip_gen: v7x
topology: tpu7x:2x2x1
jax: 0.10.0
libtpu: 0.0.40
codegen_flags: <defaults>
</compile_context>

<pallas_src>
import jax
import jax.numpy as jnp
import numpy as np
from jax.experimental import pallas as pl
from jax.experimental.pallas import tpu as pltpu


def _hop_kernel(q_ref, gp_ref, m_ref, soft_ref, logit_ref, u_ref, gs_ref):
    """One (batch-tile, hop) grid step.

    q_ref:    (bt, H)    query_vector tile
    gp_ref:   (bt, M)    global_pointer tile
    m_ref:    (bt, M, H) m_story[hop] tile (single slab per step)
    soft_ref: (bt, M)    output prob_soft   (written on last hop only)
    logit_ref:(bt, M)    output prob_logits (written on last hop only)
    u_ref:    (bt, H)    scratch: running query u (carried across hops)
    gs_ref:   (bt, M)    scratch: gp * soft of the previous hop
    """
    hop = pl.program_id(1)
    last_hop = pl.num_programs(1) - 1

    m = m_ref[...].astype(jnp.float32)        # (bt, M, H) — only big operand
    gp = gp_ref[...].astype(jnp.float32)      # (bt, M)

    @pl.when(hop == 0)
    def _init():
        u_ref[...] = q_ref[...].astype(jnp.float32)

    @pl.when(hop > 0)
    def _finish_previous_hop():
        # o_{hop-1}[b,h] = sum_m m_story[hop][b,m,h] * (gp*soft_{hop-1})[b,m]
        gs = gs_ref[...]                                     # (bt, M)
        o_k = jnp.sum(m * gs[:, :, None], axis=1)            # (bt, H)
        u_ref[...] = u_ref[...] + o_k

    u = u_ref[...]                                           # (bt, H)

    # logits = gp * <m_story[hop], u>_H  (gp folded onto the small operand)
    logits = gp * jnp.sum(m * u[:, None, :], axis=2)         # (bt, M)

    # Numerically-stable softmax over the memory axis (dim=1 in PyTorch).
    # Exact f32 division: the approx EUP reciprocal compounded across hops and
    # broke accuracy; the (bt, M) divide is negligible next to the slab DMA.
    m_max = jnp.max(logits, axis=1, keepdims=True)
    e = jnp.exp(logits - m_max)
    denom = jnp.sum(e, axis=1, keepdims=True)
    soft = e / denom

    # Carry gp*soft to the next hop's o_k (consumed only when hop < last).
    gs_ref[...] = gp * soft

    @pl.when(hop == last_hop)
    def _write_outputs():
        soft_ref[...] = soft.astype(soft_ref.dtype)
        logit_ref[...] = logits.astype(logit_ref.dtype)


def external_knowledge_forward(query_vector, global_pointer, m_story):
    """query_vector: (B, H); global_pointer: (B, M); m_story: (hops+1, B, M, H)."""
    n_hops_p1, B, M, H = m_story.shape
    max_hops = n_hops_p1 - 1
    assert max_hops >= 1

    # Batch tiling: split B into two sublane-aligned tiles when possible so the
    # leading "parallel" axis lets v7x megacore use both TensorCores.  For the
    # common small-B case (or B not divisible by 16) use a single tile.
    bt = B // 2 if (B % 16 == 0) else B
    nb = B // bt

    # VMEM budget: one double-buffered slab dominates.  Cap at 64 MiB so the
    # same parameters are valid on v7x (64 MiB physical VMEM per TC).
    itemsize = jnp.dtype(m_story.dtype).itemsize
    slab_bytes = bt * M * H * itemsize
    needed = 2 * slab_bytes + 8 * bt * (2 * M + 2 * H) * 4 + (1 << 20)
    vmem_limit = int(min(64 * 1024 * 1024, max(32 * 1024 * 1024, needed)))

    grid_spec = pltpu.PrefetchScalarGridSpec(
        num_scalar_prefetch=0,
        grid=(nb, max_hops),
        in_specs=[
            pl.BlockSpec((bt, H), lambda b, h: (b, 0)),                # query
            pl.BlockSpec((bt, M), lambda b, h: (b, 0)),                # global pointer
            pl.BlockSpec((pl.Squeezed(), bt, M, H),
                         lambda b, h: (h, b, 0, 0)),                   # m_story[hop]
        ],
        out_specs=[
            pl.BlockSpec((bt, M), lambda b, h: (b, 0)),   # prob_soft   (last hop)
            pl.BlockSpec((bt, M), lambda b, h: (b, 0)),   # prob_logits (last hop)
        ],
        scratch_shapes=[
            pltpu.VMEM((bt, H), jnp.float32),   # running query u
            pltpu.VMEM((bt, M), jnp.float32),   # gp * soft of previous hop
        ],
    )

    prob_soft, prob_logits = pl.pallas_call(
        _hop_kernel,
        grid_spec=grid_spec,
        out_shape=(
            jax.ShapeDtypeStruct((B, M), jnp.float32),
            jax.ShapeDtypeStruct((B, M), jnp.float32),
        ),
        compiler_params=pltpu.CompilerParams(
            dimension_semantics=("parallel", "arbitrary"),  # hop axis carries u
            vmem_limit_bytes=vmem_limit,
        ),
    )(query_vector, global_pointer, m_story)
    return prob_soft, prob_logits


def _reference_forward(query_vector, global_pointer, m_story):
    """Pure-JAX reference mirroring the PyTorch forward()."""
    max_hops = m_story.shape[0] - 1
    u = query_vector
    gp = global_pointer[:, :, None]
    prob_soft = None
    prob_logits = None
    for hop in range(max_hops):
        m_a = m_story[hop] * gp
        prob_logits = jnp.sum(m_a * u[:, None, :], axis=2)
        prob_soft = jax.nn.softmax(prob_logits, axis=1)
        m_c = m_story[hop + 1] * gp
        o_k = jnp.sum(m_c * prob_soft[:, :, None], axis=1)
        u = u + o_k
    return prob_soft, prob_logits


def _run_case(B, M, H, max_hops, seed):
    key = jax.random.PRNGKey(seed)
    k_q, k_gp, k_m = jax.random.split(key, 3)
    # m_story is normally produced by load_memory (embedding sums + LM hidden
    # add); here it is a deterministic input of the same shape/dtype, std 0.1
    # like C.weight.
    query_vector = jax.random.normal(k_q, (B, H), dtype=jnp.float32)
    global_pointer = jax.nn.sigmoid(
        jax.random.normal(k_gp, (B, M), dtype=jnp.float32))
    m_story = 0.1 * jax.random.normal(
        k_m, (max_hops + 1, B, M, H), dtype=jnp.float32)

    prob_soft, prob_logits = external_knowledge_forward(
        query_vector, global_pointer, m_story)
    jax.block_until_ready((prob_soft, prob_logits))

    ref_soft, ref_logits = _reference_forward(
        query_vector, global_pointer, m_story)

    # All arithmetic is exact f32 now (only summation-order differences remain).
    np.testing.assert_allclose(np.asarray(prob_logits), np.asarray(ref_logits),
                               rtol=2e-4, atol=1e-5)
    np.testing.assert_allclose(np.asarray(prob_soft), np.asarray(ref_soft),
                               rtol=2e-4, atol=1e-5)


if __name__ == "__main__":
    # Small config consistent with the module: batch B=2, memory length
    # (max_len+1) M=8, embedding_dim H=32, hops=3.  Single batch tile.
    _run_case(B=2, M=8, H=32, max_hops=3, seed=0)
    # Larger batch exercising the parallel batch-tile grid axis (B=16 -> 2
    # tiles of 8 rows, sublane-aligned) across all hops.
    _run_case(B=16, M=8, H=32, max_hops=3, seed=1)
    print("KERNEL_OK")
</pallas_src>

<mosaic_0001>
module attributes {stable_mosaic.version = 11 : i64} {
  func.func @_hop_kernel(%arg0: i32, %arg1: i32, %arg2: memref<2x32xf32, #tpu.memory_space<vmem>>, %arg3: memref<2x8xf32, #tpu.memory_space<vmem>>, %arg4: memref<1x2x8x32xf32, #tpu.memory_space<vmem>>, %arg5: memref<2x8xf32, #tpu.memory_space<vmem>>, %arg6: memref<2x8xf32, #tpu.memory_space<vmem>>, %arg7: memref<2x32xf32, #tpu.memory_space<vmem>>, %arg8: memref<2x8xf32, #tpu.memory_space<vmem>>) attributes {dimension_semantics = [#tpu.dimension_semantics<parallel>, #tpu.dimension_semantics<arbitrary>], iteration_bounds = array<i64: 1, 3>, scalar_prefetch = 0 : i64, scratch_operands = 2 : i64, tpu.core_type = #tpu.core_type<tc>, window_params = [{transform_indices = @transform_0, window_bounds = array<i64: 2, 32>}, {transform_indices = @transform_1, window_bounds = array<i64: 2, 8>}, {transform_indices = @transform_2, window_bounds = array<i64: 1, 2, 8, 32>}, {transform_indices = @transform_3, window_bounds = array<i64: 2, 8>}, {transform_indices = @transform_4, window_bounds = array<i64: 2, 8>}]} {
    %c0 = arith.constant 0 : index
    %c0_0 = arith.constant 0 : index
    %c0_1 = arith.constant 0 : index
    %c0_2 = arith.constant 0 : index
    %0 = vector.load %arg4[%c0, %c0_0, %c0_1, %c0_2] : memref<1x2x8x32xf32, #tpu.memory_space<vmem>>, vector<1x2x8x32xf32>
    %1 = vector.shape_cast %0 : vector<1x2x8x32xf32> to vector<2x8x32xf32>
    %c0_3 = arith.constant 0 : index
    %c0_4 = arith.constant 0 : index
    %2 = vector.load %arg3[%c0_3, %c0_4] : memref<2x8xf32, #tpu.memory_space<vmem>>, vector<2x8xf32>
    %c0_i32 = arith.constant 0 : i32
    %3 = arith.cmpi eq, %arg1, %c0_i32 : i32
    %4 = arith.extui %3 : i1 to i32
    %c0_i32_5 = arith.constant 0 : i32
    %5 = arith.cmpi ne, %4, %c0_i32_5 : i32
    scf.if %5 {
      %c0_15 = arith.constant 0 : index
      %c0_16 = arith.constant 0 : index
      %29 = vector.load %arg2[%c0_15, %c0_16] : memref<2x32xf32, #tpu.memory_space<vmem>>, vector<2x32xf32>
      %c0_17 = arith.constant 0 : index
      %c0_18 = arith.constant 0 : index
      %30 = vector.load %arg7[%c0_17, %c0_18] : memref<2x32xf32, #tpu.memory_space<vmem>>, vector<2x32xf32>
      tpu.vector_store %arg7[%c0_17, %c0_18], %29 {strides = array<i32>} : memref<2x32xf32, #tpu.memory_space<vmem>>, vector<2x32xf32>,
    } else {
    }
    %c0_i32_6 = arith.constant 0 : i32
    %6 = arith.cmpi sgt, %arg1, %c0_i32_6 : i32
    %7 = arith.extui %6 : i1 to i32
    %c0_i32_7 = arith.constant 0 : i32
    %8 = arith.cmpi ne, %7, %c0_i32_7 : i32
    scf.if %8 {
      %c0_15 = arith.constant 0 : index
      %c0_16 = arith.constant 0 : index
      %29 = vector.load %arg8[%c0_15, %c0_16] : memref<2x8xf32, #tpu.memory_space<vmem>>, vector<2x8xf32>
      %30 = vector.shape_cast %29 : vector<2x8xf32> to vector<2x8x1xf32>
      %31 = vector.broadcast %30 : vector<2x8x1xf32> to vector<2x8x32xf32>
      %32 = arith.mulf %1, %31 : vector<2x8x32xf32>
      %cst_17 = arith.constant dense<0.000000e+00> : vector<2x32xf32>
      %33 = vector.multi_reduction <add>, %32, %cst_17 [1] : vector<2x8x32xf32> to vector<2x32xf32>
      %c0_18 = arith.constant 0 : index
      %c0_19 = arith.constant 0 : index
      %34 = vector.load %arg7[%c0_18, %c0_19] : memref<2x32xf32, #tpu.memory_space<vmem>>, vector<2x32xf32>
      %35 = arith.addf %34, %33 : vector<2x32xf32>
      %c0_20 = arith.constant 0 : index
      %c0_21 = arith.constant 0 : index
      %36 = vector.load %arg7[%c0_20, %c0_21] : memref<2x32xf32, #tpu.memory_space<vmem>>, vector<2x32xf32>
      tpu.vector_store %arg7[%c0_20, %c0_21], %35 {strides = array<i32>} : memref<2x32xf32, #tpu.memory_space<vmem>>, vector<2x32xf32>,
    } else {
    }
    %c0_8 = arith.constant 0 : index
    %c0_9 = arith.constant 0 : index
    %9 = vector.load %arg7[%c0_8, %c0_9] : memref<2x32xf32, #tpu.memory_space<vmem>>, vector<2x32xf32>
    %10 = vector.shape_cast %9 : vector<2x32xf32> to vector<2x1x32xf32>
    %11 = vector.broadcast %10 : vector<2x1x32xf32> to vector<2x8x32xf32>
    %12 = arith.mulf %1, %11 : vector<2x8x32xf32>
    %cst = arith.constant dense<0.000000e+00> : vector<2x8xf32>
    %13 = vector.multi_reduction <add>, %12, %cst [2] : vector<2x8x32xf32> to vector<2x8xf32>
    %14 = arith.mulf %2, %13 : vector<2x8xf32>
    %cst_10 = arith.constant dense<0xFF800000> : vector<2xf32>
    %15 = vector.multi_reduction <maximumf>, %14, %cst_10 [1] : vector<2x8xf32> to vector<2xf32>
    %16 = vector.shape_cast %15 : vector<2xf32> to vector<2x1xf32>
    %17 = vector.broadcast %16 : vector<2x1xf32> to vector<2x8xf32>
    %18 = arith.subf %14, %17 : vector<2x8xf32>
    %19 = math.exp %18 : vector<2x8xf32>
    %cst_11 = arith.constant dense<0.000000e+00> : vector<2xf32>
    %20 = vector.multi_reduction <add>, %19, %cst_11 [1] : vector<2x8xf32> to vector<2xf32>
    %21 = vector.shape_cast %20 : vector<2xf32> to vector<2x1xf32>
    %22 = vector.broadcast %21 : vector<2x1xf32> to vector<2x8xf32>
    %23 = arith.divf %19, %22 : vector<2x8xf32>
    %24 = arith.mulf %2, %23 : vector<2x8xf32>
    %c0_12 = arith.constant 0 : index
    %c0_13 = arith.constant 0 : index
    %25 = vector.load %arg8[%c0_12, %c0_13] : memref<2x8xf32, #tpu.memory_space<vmem>>, vector<2x8xf32>
    tpu.vector_store %arg8[%c0_12, %c0_13], %24 {strides = array<i32>} : memref<2x8xf32, #tpu.memory_space<vmem>>, vector<2x8xf32>,
    %c2_i32 = arith.constant 2 : i32
    %26 = arith.cmpi eq, %arg1, %c2_i32 : i32
    %27 = arith.extui %26 : i1 to i32
    %c0_i32_14 = arith.constant 0 : i32
    %28 = arith.cmpi ne, %27, %c0_i32_14 : i32
    scf.if %28 {
      %c0_15 = arith.constant 0 : index
      %c0_16 = arith.constant 0 : index
      %29 = vector.load %arg5[%c0_15, %c0_16] : memref<2x8xf32, #tpu.memory_space<vmem>>, vector<2x8xf32>
      tpu.vector_store %arg5[%c0_15, %c0_16], %23 {strides = array<i32>} : memref<2x8xf32, #tpu.memory_space<vmem>>, vector<2x8xf32>,
      %c0_17 = arith.constant 0 : index
      %c0_18 = arith.constant 0 : index
      %30 = vector.load %arg6[%c0_17, %c0_18] : memref<2x8xf32, #tpu.memory_space<vmem>>, vector<2x8xf32>
      tpu.vector_store %arg6[%c0_17, %c0_18], %14 {strides = array<i32>} : memref<2x8xf32, #tpu.memory_space<vmem>>, vector<2x8xf32>,
    } else {
    }
    return
  }
  func.func @transform_0(%arg0: i32, %arg1: i32) -> (i32, i32) {
    %c0_i32 = arith.constant 0 : i32
    %c0_i32_0 = arith.constant 0 : i32
    return %arg0, %c0_i32 : i32, i32
  }
  func.func @transform_1(%arg0: i32, %arg1: i32) -> (i32, i32) {
    %c0_i32 = arith.constant 0 : i32
    %c0_i32_0 = arith.constant 0 : i32
    return %arg0, %c0_i32 : i32, i32
  }
  func.func @transform_2(%arg0: i32, %arg1: i32) -> (i32, i32, i32, i32) {
    %c0_i32 = arith.constant 0 : i32
    %c0_i32_0 = arith.constant 0 : i32
    %c0_i32_1 = arith.constant 0 : i32
    return %arg1, %arg0, %c0_i32, %c0_i32_0 : i32, i32, i32, i32
  }
  func.func @transform_3(%arg0: i32, %arg1: i32) -> (i32, i32) {
    %c0_i32 = arith.constant 0 : i32
    %c0_i32_0 = arith.constant 0 : i32
    return %arg0, %c0_i32 : i32, i32
  }
  func.func @transform_4(%arg0: i32, %arg1: i32) -> (i32, i32) {
    %c0_i32 = arith.constant 0 : i32
    %c0_i32_0 = arith.constant 0 : i32
    return %arg0, %c0_i32 : i32, i32
  }
}

</mosaic_0001>

<llo_original>
// kernel: tpu_custom_call.1
$region0: #{tpu_custom_call.1}
  #allocation0 [shape = 'u32[]', space=smem, size = 0x4, offset = 0x4, fixed_abs, tag = 'smem constant byte address 0x4 - core index']
  #allocation1 [shape = 'u32[144,128]{1,0:T(1,128)}', space=vmem, size = 0x12000, scoped, tag = 'internal scratch']
  #allocation2 [shape = 'f32[2,32]{1,0:T(2,128)}', space=vmem, size = 0x400, scoped, tag = 'scratch operand']
  #allocation3 [shape = 'f32[2,8]{1,0:T(2,128)}', space=vmem, size = 0x400, scoped, tag = 'scratch operand']
  %s0 = inlined_call_operand.hbm [shape: f32[2,32], index: 0, kind: input, shape index: {}]
  %s1 = inlined_call_operand.vmem [shape: f32[2,8], index: 1, kind: input, shape index: {}]
  %s2 = inlined_call_operand.hbm [shape: f32[4,2,8,32], index: 2, kind: input, shape index: {}]
  %s3 = inlined_call_operand.hbm [shape: f32[2,8], index: 3, kind: output, shape index: {0}]
  %s4 = inlined_call_operand.hbm [shape: f32[2,8], index: 4, kind: output, shape index: {1}]
  %5 = xla_tuple %s3, %s4
  %s6 = sld [smem:[#allocation0]]
  $region73: #{tpu_custom_call.1} parent=0
    _
  %s8 = ssub.s32 1, %s6
  %s9 = scalar_select 0, %s8, %s6
  $region1: #{tpu_custom_call.1} parent=0
    #allocation4 [shape = 'u8[1024]{0}', space=vmem, size = 0x400, scoped, tag = 'input window, operand 0, single buffered']
    #allocation5 [shape = 's32[2]{0}', space=sflag, size = 0x8, scoped, tag = 'scoped memory for tpu_custom_call.1']
    #allocation6 [shape = 's32[2]{0}', space=sflag, size = 0x8, scoped, tag = 'scoped memory for tpu_custom_call.1']
    #allocation7 [shape = 'u8[16384]{0}', space=vmem, size = 0x4000, scoped, tag = 'input window, operand 2']
    #allocation8 [shape = 's32[2]{0}', space=sflag, size = 0x8, scoped, tag = 'scoped memory for tpu_custom_call.1']
    #allocation9 [shape = 'u8[1024]{0}', space=vmem, size = 0x400, scoped, tag = 'output window, operand 0, single buffered']
    #allocation10 [shape = 'u8[1024]{0}', space=vmem, size = 0x400, scoped, tag = 'output window, operand 1, single buffered']
    #allocation11 [shape = 's32[1]{0}', space=sflag, size = 0x4, scoped, tag = 'scoped memory for tpu_custom_call.1']
    %10 = vsyncpa [#allocation5], 0
    %11 = vsyncpa [#allocation8], 0
    %s12 = scalar_lea.sflag [#allocation8], 1
    %13 = vsyncpa %s12, 0
    %14 = vsyncpa [#allocation6], 0
    %15 = vsyncpa [#allocation11], 0
    loop: start=0, step=1, limit=5
    $region2: #{tpu_custom_call.1} parent=1 // loop_pre_header
      _
    $region3: #{tpu_custom_call.1} parent=1 // loop_header
      %s17 = sphi 0, %s21
      %p18 = scmp.ge.s32.totalorder %s17, 5
      %s24 = sphi 0, %s36
      %s25 = sphi 0, %s32
      %s26 = sphi 0, %s24
      %s27 = sphi 0, %s25
      %s28 = sphi 0, %s26
      %s29 = sphi 0, %s27
      %s39 = sphi 0, %s41
      %s42 = sphi 0, %s39
      %s43 = sphi 0, %s42
      %s59 = sphi 0, %s43
      %s65 = sphi 0, %s67
      %s68 = sphi 0, %s65
      %s69 = sphi 0, %s68
      %s85 = sphi 0, %s69
      %s93 = sphi 0, %s95
      %s96 = sphi 0, %s93
      %s97 = sphi 0, %s96
      %s113 = sphi 0, %s97
      %s119 = sphi 0, %s121
      %s122 = sphi 0, %s119
      %s123 = sphi 0, %s122
      %s139 = sphi 0, %s123
      %s145 = sphi 0, %s147
      %s148 = sphi 0, %s145
      %s149 = sphi 0, %s148
      %s165 = sphi 0, %s149
    $region4: #{tpu_custom_call.1} parent=1 // loop_header_branch
      %20 = sbr.rel (%p18) target = $region8
    $region5: #{tpu_custom_call.1} parent=1 // loop_body
      %s22 = ssub.s32 %s17, 1
      %s23 = ssub.s32 %s17, 2
      %s30 = sadd.s32 1, %s25
      %p31 = scmp.ge.s32.totalorder %s30, 3
      %s32 = scalar_select %p31, 0, %s30
      %s33 = sadd.s32 1, %s24
      %s34 = scalar_select %p31, %s33, %s24
      %p35 = scmp.ge.s32.totalorder %s34, 1
      %s36 = scalar_select %p35, 0, %s34
      %s37 = ssub.s32 %s24, %s36
      %p38 = scmp.eq.s32.totalorder %s37, 0
      %s40 = sadd.s32 %s39, 1
      %s41 = scalar_select %p38, %s39, %s40
      %p44 = pneg %p38
      %p45 = scmp.eq.s32.totalorder %s17, 2
      %p46 = por %p44, %p45
      %p47 = scmp.ne.s32.totalorder %s39, %s42
      %p48 = scmp.eq.s32.totalorder %s17, 0
      %p49 = por %p47, %p48
      %p50 = scmp.ne.s32.totalorder %s39, %s42
      %p51 = scmp.eq.s32.totalorder %s22, 2
      %p52 = por %p50, %p51
      %p53 = scmp.ne.s32.totalorder %s42, %s43
      %p54 = scmp.eq.s32.totalorder %s22, 0
      %p55 = por %p53, %p54
      %p56 = scmp.ne.s32.totalorder %s42, %s43
      %p57 = scmp.eq.s32.totalorder %s23, 2
      %p58 = por %p56, %p57
      %p60 = scmp.ne.s32.totalorder %s43, %s59
      %p61 = scmp.eq.s32.totalorder %s23, 0
      %p62 = por %p60, %p61
      %s63 = ssub.s32 %s24, %s36
      %p64 = scmp.eq.s32.totalorder %s63, 0
      %s66 = sadd.s32 %s65, 1
      %s67 = scalar_select %p64, %s65, %s66
      %p70 = pneg %p64
      %p71 = scmp.eq.s32.totalorder %s17, 2
      %p72 = por %p70, %p71
      %p73 = scmp.ne.s32.totalorder %s65, %s68
      %p74 = scmp.eq.s32.totalorder %s17, 0
      %p75 = por %p73, %p74
      %p76 = scmp.ne.s32.totalorder %s65, %s68
      %p77 = scmp.eq.s32.totalorder %s22, 2
      %p78 = por %p76, %p77
      %p79 = scmp.ne.s32.totalorder %s68, %s69
      %p80 = scmp.eq.s32.totalorder %s22, 0
      %p81 = por %p79, %p80
      %p82 = scmp.ne.s32.totalorder %s68, %s69
      %p83 = scmp.eq.s32.totalorder %s23, 2
      %p84 = por %p82, %p83
      %p86 = scmp.ne.s32.totalorder %s69, %s85
      %p87 = scmp.eq.s32.totalorder %s23, 0
      %p88 = por %p86, %p87
      %s89 = ssub.s32 %s25, %s32
      %s90 = ssub.s32 %s24, %s36
      %s91 = sor.u32 %s89, %s90
      %p92 = scmp.eq.s32.totalorder %s91, 0
      %s94 = sadd.s32 %s93, 1
      %s95 = scalar_select %p92, %s93, %s94
      %p98 = pneg %p92
      %p99 = scmp.eq.s32.totalorder %s17, 2
      %p100 = por %p98, %p99
      %p101 = scmp.ne.s32.totalorder %s93, %s96
      %p102 = scmp.eq.s32.totalorder %s17, 0
      %p103 = por %p101, %p102
      %p104 = scmp.ne.s32.totalorder %s93, %s96
      %p105 = scmp.eq.s32.totalorder %s22, 2
      %p106 = por %p104, %p105
      %p107 = scmp.ne.s32.totalorder %s96, %s97
      %p108 = scmp.eq.s32.totalorder %s22, 0
      %p109 = por %p107, %p108
      %p110 = scmp.ne.s32.totalorder %s96, %s97
      %p111 = scmp.eq.s32.totalorder %s23, 2
      %p112 = por %p110, %p111
      %p114 = scmp.ne.s32.totalorder %s97, %s113
      %p115 = scmp.eq.s32.totalorder %s23, 0
      %p116 = por %p114, %p115
      %s117 = ssub.s32 %s24, %s36
      %p118 = scmp.eq.s32.totalorder %s117, 0
      %s120 = sadd.s32 %s119, 1
      %s121 = scalar_select %p118, %s119, %s120
      %p124 = pneg %p118
      %p125 = scmp.eq.s32.totalorder %s17, 2
      %p126 = por %p124, %p125
      %p127 = scmp.ne.s32.totalorder %s119, %s122
      %p128 = scmp.eq.s32.totalorder %s17, 0
      %p129 = por %p127, %p128
      %p130 = scmp.ne.s32.totalorder %s119, %s122
      %p131 = scmp.eq.s32.totalorder %s22, 2
      %p132 = por %p130, %p131
      %p133 = scmp.ne.s32.totalorder %s122, %s123
      %p134 = scmp.eq.s32.totalorder %s22, 0
      %p135 = por %p133, %p134
      %p136 = scmp.ne.s32.totalorder %s122, %s123
      %p137 = scmp.eq.s32.totalorder %s23, 2
      %p138 = por %p136, %p137
      %p140 = scmp.ne.s32.totalorder %s123, %s139
      %p141 = scmp.eq.s32.totalorder %s23, 0
      %p142 = por %p140, %p141
      %s143 = ssub.s32 %s24, %s36
      %p144 = scmp.eq.s32.totalorder %s143, 0
      %s146 = sadd.s32 %s145, 1
      %s147 = scalar_select %p144, %s145, %s146
      %p150 = pneg %p144
      %p151 = scmp.eq.s32.totalorder %s17, 2
      %p152 = por %p150, %p151
      %p153 = scmp.ne.s32.totalorder %s145, %s148
      %p154 = scmp.eq.s32.totalorder %s17, 0
      %p155 = por %p153, %p154
      %p156 = scmp.ne.s32.totalorder %s145, %s148
      %p157 = scmp.eq.s32.totalorder %s22, 2
      %p158 = por %p156, %p157
      %p159 = scmp.ne.s32.totalorder %s148, %s149
      %p160 = scmp.eq.s32.totalorder %s22, 0
      %p161 = por %p159, %p160
      %p162 = scmp.ne.s32.totalorder %s148, %s149
      %p163 = scmp.eq.s32.totalorder %s23, 2
      %p164 = por %p162, %p163
      %p166 = scmp.ne.s32.totalorder %s149, %s165
      %p167 = scmp.eq.s32.totalorder %s23, 0
      %p168 = por %p166, %p167
      %p169 = scmp.le.s32.totalorder 1, %s17
      %p170 = scmp.lt.s32.totalorder %s17, 4
      %p171 = pnand %p169, %p170
      %p172 = pneg %p171
      // Predicated region
      $region9: #{tpu_custom_call.1} parent=5 // pred_check
        _
      $region10: #{tpu_custom_call.1} parent=5 // pred_check_branch
        %174 = sbr.rel (%p171) target = $region12
      $region11: #{tpu_custom_call.1} parent=5 // pred_region
        %s175 = ssub.s32 %s17, 1
        // Predicated region
        $region13: #{tpu_custom_call.1} parent=11 // pred_check
          %p176 = pneg %p55
        $region14: #{tpu_custom_call.1} parent=11 // pred_check_branch
          %178 = sbr.rel (%p176) target = $region16
        $region15: #{tpu_custom_call.1} parent=11 // pred_region
          %s180 = ssub.s32 32, 32
          %181 = vsyncadd [#allocation5], %s180
          %s182 = smul.addr %s26, 32
          %s183 = scalar_lea.hbm %s0, %s182
          %s185 = sshll.u32 [#allocation4], 4
          %s186 = int_to_ptr.vmem [resolvable:$true] %s185
          %188 = dma.hbm_to_vmem [thread:$0]  %s183, 32, %s186, [#allocation5]
        $region16: #{tpu_custom_call.1} parent=11 // pred_fallthru
          _
        // Predicated region
        $region17: #{tpu_custom_call.1} parent=11 // pred_check
          %p189 = pneg %p81
        $region18: #{tpu_custom_call.1} parent=11 // pred_check_branch
          %191 = sbr.rel (%p189) target = $region20
        $region19: #{tpu_custom_call.1} parent=11 // pred_region
          %p192 = scmp.lt.s32.totalorder %s26, 0
          %s193 = scalar_select %p192, %s26, 0
          %s194 = smul.addr %s193, 2
          %s195 = scalar_lea.vmem %s1, %s194
        $region20: #{tpu_custom_call.1} parent=11 // pred_fallthru
          _
      $region12: #{tpu_custom_call.1} parent=5 // pred_fallthru
        _
      %p196 = scmp.lt.s32.totalorder %s17, 3
      // Predicated region
      $region21: #{tpu_custom_call.1} parent=5 // pred_check
        %p197 = pneg %p196
      $region22: #{tpu_custom_call.1} parent=5 // pred_check_branch
        %199 = sbr.rel (%p197) target = $region24
      $region23: #{tpu_custom_call.1} parent=5 // pred_region
        // Predicated region
        $region25: #{tpu_custom_call.1} parent=23 // pred_check
          %p200 = pneg %p103
        $region26: #{tpu_custom_call.1} parent=23 // pred_check_branch
          %202 = sbr.rel (%p200) target = $region28
        $region27: #{tpu_custom_call.1} parent=23 // pred_region
          %s203 = sand.u32 %s93, 1
          %s204 = scalar_lea.sflag [#allocation8], %s203
          %s205 = sand.u32 %s93, 1
          %s206 = smul.addr %s205, 16
          %s207 = scalar_lea.vmem [#allocation7], %s206
          %s208 = smul.u32 2, %s24
          %s210 = ssub.s32 256, 256
          %211 = vsyncadd %s204, %s210
          %s212 = smul.addr %s25, 2
          %s213 = sadd.s32 %s208, %s212
          %s214 = smul.addr %s213, 128
          %s215 = scalar_lea.hbm %s2, %s214
          %s216 = sshll.u32 %s207, 4
          %s217 = int_to_ptr.vmem [resolvable:$true] %s216
          %222 = dma.hbm_to_vmem [thread:$0]  %s215, 256, %s217, %s204, 128, 128, 8
        $region28: #{tpu_custom_call.1} parent=23 // pred_fallthru
          _
      $region24: #{tpu_custom_call.1} parent=5 // pred_fallthru
        _
      %p223 = scmp.le.s32.totalorder 1, %s17
      %p224 = scmp.lt.s32.totalorder %s17, 4
      %p225 = pnand %p223, %p224
      %p226 = pneg %p225
      // Predicated region
      $region29: #{tpu_custom_call.1} parent=5 // pred_check
        _
      $region30: #{tpu_custom_call.1} parent=5 // pred_check_branch
        %228 = sbr.rel (%p225) target = $region32
      $region31: #{tpu_custom_call.1} parent=5 // pred_region
        %s229 = ssub.s32 %s17, 1
        // Predicated region
        $region33: #{tpu_custom_call.1} parent=31 // pred_check
          %p230 = pneg %p55
        $region34: #{tpu_custom_call.1} parent=31 // pred_check_branch
          %232 = sbr.rel (%p230) target = $region36
        $region35: #{tpu_custom_call.1} parent=31 // pred_region
          %233 = dma.done [#allocation5], 32
        $region36: #{tpu_custom_call.1} parent=31 // pred_fallthru
          _
        %s234 = sand.u32 %s96, 1
        %s235 = scalar_lea.sflag [#allocation8], %s234
        %s236 = sand.u32 %s96, 1
        %s237 = smul.addr %s236, 16
        %s238 = scalar_lea.vmem [#allocation7], %s237
        // Predicated region
        $region37: #{tpu_custom_call.1} parent=31 // pred_check
          %p239 = pneg %p109
        $region38: #{tpu_custom_call.1} parent=31 // pred_check_branch
          %241 = sbr.rel (%p239) target = $region40
        $region39: #{tpu_custom_call.1} parent=31 // pred_region
          %242 = dma.done %s235, 256
        $region40: #{tpu_custom_call.1} parent=31 // pred_fallthru
          _
        %p243 = pneg %p55
        %p244 = pneg %p52
        %p245 = scmp.lt.s32.totalorder %s26, 0
        %s246 = scalar_select %p245, %s26, 0
        %s247 = smul.addr %s246, 2
        %s248 = scalar_lea.vmem %s1, %s247
        %p249 = pneg %p81
        %p250 = pneg %p78
        %s251 = sand.u32 %s96, 1
        %s252 = scalar_lea.sflag [#allocation8], %s251
        %s253 = sand.u32 %s96, 1
        %s254 = smul.addr %s253, 16
        %s255 = scalar_lea.vmem [#allocation7], %s254
        %p256 = pneg %p109
        %p257 = pneg %p106
        %p258 = pneg %p135
        %p259 = pneg %p132
        %p260 = pneg %p161
        %p261 = pneg %p158
        %p262 = scmp.lt.s32.totalorder %s26, 0
        %s263 = scalar_select %p262, %s26, 0
        %s264 = smul.addr %s263, 2
        %s265 = scalar_lea.vmem %s1, %s264
        %s266 = smul.u32 2, %s26
        %v267 = vld [vmem:[%s238] sm:$0xff]
        %v268 = vld [vmem:[%s238 + $0x8] sm:$0xff]
        %v269 = vld [vmem:[%s265] sm:$0x3]
        %p270 = scmp.eq.s32.totalorder %s27, 0
        // Predicated region
        $region41: #{tpu_custom_call.1} parent=31 // pred_check
          %p271 = pneg %p270
        $region42: #{tpu_custom_call.1} parent=31 // pred_check_branch
          %273 = sbr.rel (%p271) target = $region44
        $region43: #{tpu_custom_call.1} parent=31 // pred_region
          %v274 = vld [vmem:[#allocation4] sm:$0x3]
          %vm275 = vcmask 254976
          %276 = vst.msk [vmem:[#allocation2] sm:$0x3] %vm275, %v274
        $region44: #{tpu_custom_call.1} parent=31 // pred_fallthru
          _
        %p277 = scmp.gt.s32.totalorder %s27, 0
        // Predicated region
        $region45: #{tpu_custom_call.1} parent=31 // pred_check
          %p278 = pneg %p277
        $region46: #{tpu_custom_call.1} parent=31 // pred_check_branch
          %280 = sbr.rel (%p278) target = $region48
        $region47: #{tpu_custom_call.1} parent=31 // pred_region
          %v281 = vld [vmem:[#allocation3] sm:$0x3]
          %v282 = vlaneseq
          %v283 = vshrl.u32 %v282, 7
          %v284 = vsub.s32 0, %v283
          %v285 = vrot.slane %v281, %v284
          %287 = vbcast.lane.b32.xlu0 %v285, 256
          %v288 = vpop.permute.xlu0 %287
          %v289 = vlaneseq
          %v290 = vshrl.u32 %v289, 7
          %v291 = vsub.s32 1, %v290
          %v292 = vrot.slane %v281, %v291
          %294 = vbcast.lane.b32.xlu0 %v292, 256
          %v295 = vpop.permute.xlu0 %294
          %v296 = vmul.f32 %v267, %v288
          %v297 = vmul.f32 %v268, %v295
          %vm298 = vcmask 261120
          %v299 = vsel %vm298, %v296, 0.0
          %v300 = vrot.slane %v299, 4
          %v301 = vadd.f32 %v299, %v300
          %v302 = vrot.slane %v301, 2
          %v303 = vadd.f32 %v301, %v302
          %v304 = vrot.slane %v303, 1
          %v305 = vadd.f32 %v303, %v304
          %v306 = vsel %vm298, %v297, 0.0
          %v307 = vrot.slane %v306, 4
          %v308 = vadd.f32 %v306, %v307
          %v309 = vrot.slane %v308, 2
          %v310 = vadd.f32 %v308, %v309
          %v311 = vrot.slane %v310, 1
          %v312 = vadd.f32 %v310, %v311
          %v313 = vld [vmem:[#allocation2] sm:$0x3]
          %vm316 = vcmask 1041409
          %v317 = vsel %vm316, %v312, %v305
          %v319 = vadd.f32 %v313, %v317
          %vm320 = vcmask 254976
          %321 = vst.msk [vmem:[#allocation2] sm:$0x3] %vm320, %v319
        $region48: #{tpu_custom_call.1} parent=31 // pred_fallthru
          _
        %v322 = vld [vmem:[#allocation2] sm:$0x3]
        %v325 = vunpack.c.l.s4 1966171168
        %v326 = vunpack.c.0.s8 %v325
        %v327 = vlaneseq
        %v328 = vshrl.u32 %v327, 7
        %v329 = vsub.s32 %v326, %v328
        %v330 = vrot.slane %v322, %v329
        %v331 = vcombine.high %v330, %v330
        %v333 = vunpack.c.l.s4 1966171168
        %v334 = vunpack.c.0.s8 %v333
        %v335 = vlaneseq
        %v336 = vshrl.u32 %v335, 7
        %v337 = vsub.s32 %v334, %v336
        %v338 = vrot.slane %v330, %v337
        %v340 = vunpack.c.l.s4 1966171168
        %v341 = vunpack.c.0.s8 %v340
        %v342 = vlaneseq
        %v343 = vshrl.u32 %v342, 7
        %v344 = vsub.s32 %v341, %v343
        %v345 = vrot.slane %v331, %v344
        %v346 = vlaneseq
        %v347 = vshrl.u32 %v346, 7
        %v348 = vsub.s32 0, %v347
        %v349 = vrot.slane %v338, %v348
        %v350 = vlaneseq
        %v351 = vshrl.u32 %v350, 7
        %v352 = vsub.s32 0, %v351
        %v353 = vrot.slane %v345, %v352
        %v356 = vmul.f32 %v267, %v349
        %v357 = vmul.f32 %v268, %v353
        %vm358 = vcmask 261120
        %v359 = vsel %vm358, %v356, 0.0
        %360 = vadd.xlane.f32.xlu0 %v359
        %v361 = vpop.xlane.xlu0 %360
        %v362 = vsel %vm358, %v357, 0.0
        %363 = vadd.xlane.f32.xlu0 %v362
        %v364 = vpop.xlane.xlu0 %363
        %v367 = vlaneseq
        %v368 = vand.u32 %v367, 127
        %v369 = vlaneseq
        %v370 = vshrl.u32 %v369, 7
        %v371 = vsub.s32 %v368, %v370
        %v372 = vrot.slane %v361, %v371
        %v373 = vlaneseq
        %v374 = vshrl.u32 %v373, 7
        %v375 = vsub.s32 %v368, %v374
        %v376 = vrot.slane %v364, %v375
        %vm377 = vcmask 1041409
        %v378 = vsel %vm377, %v376, %v372
        %v380 = vmul.f32 %v269, %v378
        %vm381 = vcmask 58368
        %v382 = vsel %vm381, %v380, -inf
        %383 = vmax.xlane.f32.xlu0 %v382
        %v384 = vpop.xlane.xlu0 %383
        %v385 = vsub.f32 %v380, %v384
        %v386 = vmul.f32 %v385, 1.442695
        %v387 = vpow.pop %v386
        %v388 = vsel %vm381, %v387, 0.0
        %389 = vadd.xlane.f32.xlu0 %v388
        %v390 = vpop.xlane.xlu0 %389
        %v391 = vrcp.pop %v390
        %v392 = vmul.f32 %v387, %v391
        %v393 = vmul.f32 %v269, %v392
        %394 = vst.msk [vmem:[#allocation3] sm:$0x3] %vm381, %v393
        %p395 = scmp.eq.s32.totalorder %s27, 2
        // Predicated region
        $region49: #{tpu_custom_call.1} parent=31 // pred_check
          %p396 = pneg %p395
        $region50: #{tpu_custom_call.1} parent=31 // pred_check_branch
          %398 = sbr.rel (%p396) target = $region52
        $region51: #{tpu_custom_call.1} parent=31 // pred_region
          %399 = vst.msk [vmem:[#allocation9] sm:$0x3] %vm381, %v392
          %400 = vst.msk [vmem:[#allocation10] sm:$0x3] %vm381, %v380
        $region52: #{tpu_custom_call.1} parent=31 // pred_fallthru
          _
        // Predicated region
        $region53: #{tpu_custom_call.1} parent=31 // pred_check
          %p401 = pneg %p132
        $region54: #{tpu_custom_call.1} parent=31 // pred_check_branch
          %403 = sbr.rel (%p401) target = $region56
        $region55: #{tpu_custom_call.1} parent=31 // pred_region
          %s405 = ssub.s32 32, 32
          %406 = vsyncadd [#allocation6], %s405
          %s407 = smul.addr %s26, 32
          %s408 = scalar_lea.hbm %s3, %s407
          %s410 = sshll.u32 [#allocation9], 4
          %s411 = int_to_ptr.vmem [resolvable:$true] %s410
          %413 = dma.vmem_to_hbm [thread:$0]  %s411, 32, %s408, [#allocation6]
        $region56: #{tpu_custom_call.1} parent=31 // pred_fallthru
          _
        // Predicated region
        $region57: #{tpu_custom_call.1} parent=31 // pred_check
          %p414 = pneg %p158
        $region58: #{tpu_custom_call.1} parent=31 // pred_check_branch
          %416 = sbr.rel (%p414) target = $region60
        $region59: #{tpu_custom_call.1} parent=31 // pred_region
          %s418 = ssub.s32 32, 32
          %419 = vsyncadd [#allocation11], %s418
          %s420 = smul.addr %s26, 32
          %s421 = scalar_lea.hbm %s4, %s420
          %s423 = sshll.u32 [#allocation10], 4
          %s424 = int_to_ptr.vmem [resolvable:$true] %s423
          %426 = dma.vmem_to_hbm [thread:$0]  %s424, 32, %s421, [#allocation11]
        $region60: #{tpu_custom_call.1} parent=31 // pred_fallthru
          _
        // Predicated region
        $region61: #{tpu_custom_call.1} parent=31 // pred_check
          %p427 = pneg %p132
        $region62: #{tpu_custom_call.1} parent=31 // pred_check_branch
          %429 = sbr.rel (%p427) target = $region64
        $region63: #{tpu_custom_call.1} parent=31 // pred_region
          %430 = dma.done [#allocation6], 32
        $region64: #{tpu_custom_call.1} parent=31 // pred_fallthru
          _
        // Predicated region
        $region65: #{tpu_custom_call.1} parent=31 // pred_check
          %p431 = pneg %p158
        $region66: #{tpu_custom_call.1} parent=31 // pred_check_branch
          %433 = sbr.rel (%p431) target = $region68
        $region67: #{tpu_custom_call.1} parent=31 // pred_region
          %434 = dma.done [#allocation11], 32
        $region68: #{tpu_custom_call.1} parent=31 // pred_fallthru
          _
      $region32: #{tpu_custom_call.1} parent=5 // pred_fallthru
        _
      %p435 = scmp.le.s32.totalorder 2, %s17
      // Predicated region
      $region69: #{tpu_custom_call.1} parent=5 // pred_check
        %p436 = pneg %p435
      $region70: #{tpu_custom_call.1} parent=5 // pred_check_branch
        %438 = sbr.rel (%p436) target = $region72
      $region71: #{tpu_custom_call.1} parent=5 // pred_region
        %s439 = ssub.s32 %s17, 2
      $region72: #{tpu_custom_call.1} parent=5 // pred_fallthru
        _
    $region6: #{tpu_custom_call.1} parent=1 // loop_footer
      %s21 = sadd.s32 1, %s17
    $region7: #{tpu_custom_call.1} parent=1 // loop_footer_branch
      %16 = sbr.rel target = $region3
    $region8: #{tpu_custom_call.1} parent=1 // loop_exit
      _
    %440 = vsyncpa [#allocation5], 1
    %s441 = scalar_lea.sflag [#allocation5], 1
    %442 = vsyncpa %s441, 1
    %443 = vsyncpa [#allocation8], 1
    %s444 = scalar_lea.sflag [#allocation8], 1
    %445 = vsyncpa %s444, 1
    %446 = vsyncpa [#allocation6], 1
    %s447 = scalar_lea.sflag [#allocation6], 1
    %448 = vsyncpa %s447, 1
    %449 = vsyncpa [#allocation11], 1

</llo_original>
